<compile_context>
chip_gen: v7x
topology: tpu7x:2x2x1
jax: 0.10.0
libtpu: 0.0.40
codegen_flags: <defaults>
</compile_context>

<pallas_src>
import math

import jax
import jax.numpy as jnp
from jax.experimental import pallas as pl
from jax.experimental.pallas import tpu as pltpu


def flatten_view(x):
    """Zero-cost flatten (pure view under jit) — the preferred production path."""
    return jnp.reshape(x, (x.shape[0], -1))


def _copy_kernel(x_ref, o_ref):
    # One lane-dense, sublane-full (block_rows, cols) slab per grid step.
    o_ref[...] = x_ref[...]


def _largest_divisor_at_most(n, cap):
    cap = max(1, min(cap, n))
    for d in range(cap, 0, -1):
        if n % d == 0:
            return d
    return 1


_LANE = 128
_MAX_LANES = 2048                 # block width target: 512-2048 lanes
_TILE_BYTES = 4 * 1024 * 1024     # per-block bytes; 4 buffers -> <= 16 MiB VMEM
_VMEM_LIMIT = 32 * 1024 * 1024    # explicit scoped-VMEM request (safe on v5e/v6e/v7x)


def flatten_forward(x, *, alias_in_out=False):
    """Pallas implementation of FlattenLayer.forward: (N, ...) -> (N, prod(...))."""
    n = x.shape[0]
    f = math.prod(x.shape[1:]) if x.ndim > 1 else 1
    total = n * f
    itemsize = jnp.dtype(x.dtype).itemsize

    # Sublane packing unit: 8 rows for 32-bit, 16 for bf16, 32 for int8/fp8.
    sub = max(8, 32 // itemsize)
    unit = sub * _LANE

    # Row-major flatten (free under jit), then pad to a multiple of the
    # (sub x 128) base tile so every block is aligned and every store unmasked.
    flat = jnp.reshape(x, (total,))
    padded = -(-total // unit) * unit
    if padded != total:
        flat = jnp.pad(flat, (0, padded - total))

    # Factor the padded buffer into a (rows, cols) slab:
    #   cols  = 128 * (largest divisor of #base-tiles, capped at 2048 lanes)
    #   rows  = multiple of `sub`  -> sublane-full vregs, dense DMA.
    m = padded // unit
    c128 = _largest_divisor_at_most(m, _MAX_LANES // _LANE)
    cols = _LANE * c128
    r_units = m // c128
    rows = sub * r_units

    # Rows per block: multiple of `sub`, divides `rows`, block <= _TILE_BYTES.
    max_units_per_block = max(1, _TILE_BYTES // (sub * cols * itemsize))
    units_per_block = _largest_divisor_at_most(r_units, max_units_per_block)
    block_rows = sub * units_per_block
    grid = (rows // block_rows,)

    slab = jnp.reshape(flat, (rows, cols))

    out_slab = pl.pallas_call(
        _copy_kernel,
        out_shape=jax.ShapeDtypeStruct((rows, cols), x.dtype),
        grid=grid,
        in_specs=[pl.BlockSpec((block_rows, cols), lambda i: (i, 0))],
        out_specs=pl.BlockSpec((block_rows, cols), lambda i: (i, 0)),
        compiler_params=pltpu.CompilerParams(
            dimension_semantics=("parallel",),
            vmem_limit_bytes=_VMEM_LIMIT,
        ),
        input_output_aliases=({0: 0} if alias_in_out else {}),
    )(slab)

    # Undo the packing (free reshapes / a cheap prefix slice if padded).
    out_flat = jnp.reshape(out_slab, (padded,))
    if padded != total:
        out_flat = out_flat[:total]
    return jnp.reshape(out_flat, (n, f))


if __name__ == "__main__":
    key = jax.random.PRNGKey(0)
    x = jax.random.normal(key, (2, 4, 16, 16), dtype=jnp.float32)

    fwd = jax.jit(flatten_forward, static_argnames=("alias_in_out",))
    expected = jnp.reshape(x, (x.shape[0], -1))

    # Default path: copy into a fresh output buffer.
    out = jax.block_until_ready(fwd(x))
    assert out.shape == (2, 4 * 16 * 16), out.shape
    assert out.dtype == x.dtype
    assert bool(jnp.array_equal(out, expected))

    # Aliased path (perf-review item 1): output reuses the slab's HBM buffer.
    out_alias = jax.block_until_ready(fwd(x, alias_in_out=True))
    assert bool(jnp.array_equal(out_alias, expected))

    # Ragged feature size (not a multiple of 128): exercises the padded path
    # that replaces the old `tf = f` fallback.
    x2 = jax.random.normal(jax.random.PRNGKey(1), (2, 3, 5, 7), dtype=jnp.float32)
    out2 = jax.block_until_ready(fwd(x2))
    assert out2.shape == (2, 3 * 5 * 7), out2.shape
    assert bool(jnp.array_equal(out2, jnp.reshape(x2, (2, -1))))

    print("KERNEL_OK")
</pallas_src>

<mosaic_0001>
module attributes {stable_mosaic.version = 11 : i64} {
  func.func @_copy_kernel(%arg0: i32, %arg1: memref<8x256xf32, #tpu.memory_space<vmem>>, %arg2: memref<8x256xf32, #tpu.memory_space<vmem>>) attributes {dimension_semantics = [#tpu.dimension_semantics<parallel>], iteration_bounds = array<i64: 1>, scalar_prefetch = 0 : i64, scratch_operands = 0 : i64, tpu.core_type = #tpu.core_type<tc>, window_params = [{transform_indices = @transform_0, window_bounds = array<i64: 8, 256>}, {transform_indices = @transform_1, window_bounds = array<i64: 8, 256>}]} {
    %c0 = arith.constant 0 : index
    %c0_0 = arith.constant 0 : index
    %0 = vector.load %arg1[%c0, %c0_0] : memref<8x256xf32, #tpu.memory_space<vmem>>, vector<8x256xf32>
    %c0_1 = arith.constant 0 : index
    %c0_2 = arith.constant 0 : index
    %1 = vector.load %arg2[%c0_1, %c0_2] : memref<8x256xf32, #tpu.memory_space<vmem>>, vector<8x256xf32>
    tpu.vector_store %arg2[%c0_1, %c0_2], %0 {strides = array<i32>} : memref<8x256xf32, #tpu.memory_space<vmem>>, vector<8x256xf32>,
    return
  }
  func.func @transform_0(%arg0: i32) -> (i32, i32) {
    %c0_i32 = arith.constant 0 : i32
    %c0_i32_0 = arith.constant 0 : i32
    return %arg0, %c0_i32 : i32, i32
  }
  func.func @transform_1(%arg0: i32) -> (i32, i32) {
    %c0_i32 = arith.constant 0 : i32
    %c0_i32_0 = arith.constant 0 : i32
    return %arg0, %c0_i32 : i32, i32
  }
}

</mosaic_0001>

<llo_original>
// kernel: flatten_forward.1
$region0: #{flatten_forward.1}
  #allocation0 [shape = 'u32[]', space=smem, size = 0x4, offset = 0x4, fixed_abs, tag = 'smem constant byte address 0x4 - core index']
  #allocation1 [shape = 'u32[144,128]{1,0:T(1,128)}', space=vmem, size = 0x12000, scoped, tag = 'internal scratch']
  %s0 = inlined_call_operand.vmem [shape: f32[8,256], index: 0, kind: input, shape index: {}]
  %s1 = inlined_call_operand.vmem [shape: f32[8,256], index: 1, kind: output, shape index: {}]
  %s2 = sld [smem:[#allocation0]]
  $region14: #{flatten_forward.1} parent=0
    _
  %s4 = ssub.s32 1, %s2
  %s5 = scalar_select 0, %s4, %s2
  // Predicated region
  $region2: #{flatten_forward.1} parent=0 // pred_check
    _
  $region3: #{flatten_forward.1} parent=0 // pred_check_branch
    %7 = sbr.rel (0) target = $region5
  $region4: #{flatten_forward.1} parent=0 // pred_region
    _
  $region5: #{flatten_forward.1} parent=0 // pred_fallthru
    _
  %v8 = vld [vmem:[%s0] sm:$0xff]
  %v9 = vld [vmem:[%s0 + $0x8] sm:$0xff]
  %10 = vst [vmem:[%s1] sm:$0xff] %v8
  %11 = vst [vmem:[%s1 + $0x8] sm:$0xff] %v9
  // Predicated region
  $region6: #{flatten_forward.1} parent=0 // pred_check
    _
  $region7: #{flatten_forward.1} parent=0 // pred_check_branch
    %13 = sbr.rel (0) target = $region9
  $region8: #{flatten_forward.1} parent=0 // pred_region
    _
  $region9: #{flatten_forward.1} parent=0 // pred_fallthru
    _
  // Predicated region
  $region10: #{flatten_forward.1} parent=0 // pred_check
    _
  $region11: #{flatten_forward.1} parent=0 // pred_check_branch
    %15 = sbr.rel (0) target = $region13
  $region12: #{flatten_forward.1} parent=0 // pred_region
    _
  $region13: #{flatten_forward.1} parent=0 // pred_fallthru
    _

</llo_original>
